<compile_context>
chip_gen: v7x
topology: tpu7x:2x2x1
jax: 0.10.0
libtpu: 0.0.40
codegen_flags: <defaults>
</compile_context>

<pallas_src>
import math

import numpy as np
import jax
import jax.numpy as jnp
from jax.experimental import pallas as pl
from jax.experimental.pallas import tpu as pltpu


_LANE = 128
_SUBLANE = 8


def make_positional_encoding_table(hidden, max_len=5000, dtype=jnp.float32):
    """Replicates PositionalEncoding.__init__ buffer `pe` of shape (1, max_len, hidden).

    Build this once in the activation dtype (e.g. bf16 for bf16 models) and reuse it, so the
    forward pass never has to cast the whole table.
    """
    position = np.arange(0, max_len, dtype=np.float32)[:, None]               # (max_len, 1)
    div_term = np.exp(
        np.arange(0, hidden, 2, dtype=np.float32) * -(math.log(10000.0) / hidden)
    )                                                                          # (hidden/2,)
    pe = np.zeros((max_len, hidden), dtype=np.float32)
    pe[:, 0::2] = np.sin(position * div_term)
    pe[:, 1::2] = np.cos(position * div_term)
    return jnp.asarray(pe[None, :, :], dtype=dtype)                            # (1, max_len, hidden)


def _as_i32(v):
    """Python int -> equivalent signed 32-bit value (two's complement)."""
    v &= 0xFFFFFFFF
    return v - (1 << 32) if v >= (1 << 31) else v


def _lowbias32_py(x):
    """Host-side lowbias32 integer hash (used to decorrelate nearby user seeds)."""
    x &= 0xFFFFFFFF
    x ^= x >> 16
    x = (x * 0x7FEB352D) & 0xFFFFFFFF
    x ^= x >> 15
    x = (x * 0x846CA68B) & 0xFFFFFFFF
    x ^= x >> 16
    return x


def _lsr(x, k):
    """Logical right shift on int32 arrays (arithmetic shift + mask)."""
    return (x >> k) & jnp.int32((1 << (32 - k)) - 1)


def _mix32(x):
    """In-kernel lowbias32 hash on int32 arrays (bit pattern identical to uint32 math)."""
    x = x ^ _lsr(x, 16)
    x = x * jnp.int32(0x7FEB352D)
    x = x ^ _lsr(x, 15)
    x = x * jnp.int32(_as_i32(0x846CA68B))
    x = x ^ _lsr(x, 16)
    return x


def _block_budget():
    """(target bytes per x/out block, vmem_limit_bytes), tuned per TPU generation."""
    try:
        info = pltpu.get_tpu_info()
        if int(info.vmem_capacity_bytes) <= 64 * 1024 * 1024:
            # v7x-class (64 MiB VMEM, ~3.2 TB/s HBM): bigger blocks amortize the
            # ~0.35us per-grid-step overhead. 2x8 in + 2x8 out + pe << 44 MiB.
            return 8 * 1024 * 1024, 44 * 1024 * 1024
    except Exception:
        pass
    # v5e / v6e (128 MiB VMEM) or unknown backend: 4 MiB blocks already sit on the
    # measured 85-86% roofline plateau.
    return 4 * 1024 * 1024, 32 * 1024 * 1024


def positional_encoding_forward(x, pe, dropout_p=0.0, training=False, seed=0):
    """y = dropout(x + pe[:, :S]) with x of shape (B, S, H); pe is the (1, max_len, H) table."""
    B, S, H = x.shape
    max_len = pe.shape[1]
    assert pe.shape[0] == 1 and pe.shape[2] == H and S <= max_len
    dropout_p = float(dropout_p)
    assert 0.0 <= dropout_p <= 1.0, "dropout_p must be in [0, 1]"

    if pe.dtype != x.dtype:
        # Fallback only: prefer building the table in the activation dtype (see
        # make_positional_encoding_table) so this whole-table cast never runs per call.
        pe = pe.astype(x.dtype)

    apply_dropout = bool(training) and dropout_p > 0.0
    if apply_dropout and dropout_p >= 1.0:
        # torch.nn.Dropout(p=1) zeroes everything in training mode; 1/(1-p) is inf -> guard.
        return jnp.zeros_like(x)

    itemsize = jnp.dtype(x.dtype).itemsize
    C = S * H
    target_block_bytes, vmem_limit = _block_budget()

    if C % _LANE == 0:
        # Free reshape of the full table: flattened columns [0, S*H) are exactly pe[:, :S, :].
        pe2 = pe.reshape(1, max_len * H)
        cap_cols = max(_LANE, (target_block_bytes // (_SUBLANE * itemsize)) // _LANE * _LANE)
        tC = min(C, cap_cols)            # multiple of 128; need NOT divide C (cdiv grid below)
    else:
        # TODO(synk): rare non-lane-aligned fallback (S*H % 128 != 0) uses a full-width block
        # and a one-time static pe slice; correct but not tiled along the fused axis.
        pe2 = jax.lax.slice(pe, (0, 0, 0), (1, S, H)).reshape(1, C)
        tC = C

    x2 = x.reshape(B, C)                 # free reshape (contiguous)

    rows_fit = max(1, target_block_bytes // (tC * itemsize))
    if rows_fit >= B:
        bB = B
    else:
        bB = min(B, max(_SUBLANE, (rows_fit // _SUBLANE) * _SUBLANE))
    nc = pl.cdiv(C, tC)
    nb = pl.cdiv(B, bB)

    # Megacore: if everything collapsed into one big block, split the column axis so a
    # v7x chip can shard the two steps across its TensorCores (neutral on v5e/v6e).
    if (nc * nb == 1 and C % _LANE == 0 and C >= 2 * _LANE
            and B * C * itemsize >= 2 * 1024 * 1024):
        tC = max(_LANE, ((C // _LANE + 1) // 2) * _LANE)
        nc = pl.cdiv(C, tC)

    keep_scale = 1.0 / (1.0 - dropout_p) if apply_dropout else 1.0
    # Integer keep-threshold on the signed-int32 view of uniform 32-bit hash output:
    # P(bits >= thr - 2^31) = 1 - p (to within 2^-32).
    thr_i32 = int(min(round(dropout_p * 2.0 ** 32), 2.0 ** 32 - 1)) - 2 ** 31

    def kernel(seed_ref, x_ref, pe_ref, o_ref):
        # x_ref: (bB, tC), pe_ref: (1, tC) -- broadcasts over the batch rows of this block.
        y = x_ref[...] + pe_ref[...]
        if apply_dropout:
            # Counter-based PRNG: hash the global element index mixed with the (host-hashed)
            # seed. Pure VPU int32 ops -> lowers on TPU and in interpret mode; the kernel
            # stays HBM-bandwidth bound.
            row = jax.lax.broadcasted_iota(jnp.int32, y.shape, 0) + pl.program_id(1) * bB
            col = jax.lax.broadcasted_iota(jnp.int32, y.shape, 1) + pl.program_id(0) * tC
            idx = row * jnp.int32(_as_i32(C)) + col          # unique per element (mod 2^32)
            bits = _mix32(idx ^ seed_ref[0])
            keep = bits >= jnp.int32(thr_i32)
            y = jnp.where(keep, y * jnp.asarray(keep_scale, y.dtype), jnp.zeros_like(y))
        o_ref[...] = y

    # Hash the user seed on the host so nearby seeds don't give correlated masks.
    seed_arr = jnp.array([_as_i32(_lowbias32_py(int(seed)))], dtype=jnp.int32)

    cost = pl.CostEstimate(
        flops=B * C * (2 if apply_dropout else 1),
        transcendentals=0,
        bytes_accessed=2 * B * C * itemsize + C * itemsize,  # x read + out write + pe read once
    )

    out2 = pl.pallas_call(
        kernel,
        out_shape=jax.ShapeDtypeStruct((B, C), x.dtype),
        grid_spec=pltpu.PrefetchScalarGridSpec(
            num_scalar_prefetch=1,                   # seed lands in SMEM
            grid=(nc, nb),                           # batch innermost -> pe tile stays VMEM-resident
            in_specs=[
                pl.BlockSpec((bB, tC), lambda c, b, seed: (b, c)),   # x
                pl.BlockSpec((1, tC), lambda c, b, seed: (0, c)),    # pe (index independent of b)
            ],
            out_specs=pl.BlockSpec((bB, tC), lambda c, b, seed: (b, c)),
        ),
        compiler_params=pltpu.CompilerParams(
            dimension_semantics=("parallel", "parallel"),
            vmem_limit_bytes=vmem_limit,
        ),
        cost_estimate=cost,
        # TODO(synk): add input_output_aliases (x2 -> out) when the caller can donate x;
        # index semantics with scalar-prefetch operands need verification first.
    )(seed_arr, x2, pe2)

    return out2.reshape(B, S, H)


if __name__ == "__main__":
    # Small shapes consistent with the module: batch=2, seq=8, hidden=32.
    B, S, H = 2, 8, 32
    dropout_p = 0.1
    max_len = 5000

    key = jax.random.PRNGKey(0)
    x = jax.random.normal(key, (B, S, H), dtype=jnp.float32)

    pe = make_positional_encoding_table(H, max_len=max_len, dtype=jnp.float32)

    # Eval-mode forward (dropout is identity), matching module.eval().
    y = positional_encoding_forward(x, pe, dropout_p=dropout_p, training=False, seed=0)
    y = jax.block_until_ready(y)

    ref = np.asarray(x) + np.asarray(pe[:, :S, :])
    assert y.shape == x.shape and y.dtype == x.dtype
    np.testing.assert_allclose(np.asarray(y), ref, rtol=1e-6, atol=1e-6)

    # Training-mode forward: every output element must be either 0 (dropped) or
    # (x + pe) * 1/(1-p) (kept). The mask comes from a counter-based hash PRNG, so it is
    # statistically equivalent to torch.nn.Dropout but not bit-exact with torch's RNG.
    y_tr = positional_encoding_forward(x, pe, dropout_p=dropout_p, training=True, seed=123)
    y_tr = np.asarray(jax.block_until_ready(y_tr))
    scaled = ref / (1.0 - dropout_p)
    is_zero = np.isclose(y_tr, 0.0, atol=1e-6)
    is_kept = np.isclose(y_tr, scaled, rtol=1e-5, atol=1e-6)
    assert bool(np.all(is_zero | is_kept)), \
        "training-mode dropout produced values that are neither 0 nor scaled keep"
    assert bool(np.any(is_kept)) and bool(np.any(is_zero & ~is_kept)), \
        "training-mode dropout mask is degenerate (all kept or all dropped)"

    print("KERNEL_OK")
</pallas_src>

<mosaic_0001>
module attributes {stable_mosaic.version = 11 : i64} {
  func.func @kernel(%arg0: i32, %arg1: i32, %arg2: memref<1xi32, #tpu.memory_space<smem>>, %arg3: memref<2x256xf32, #tpu.memory_space<vmem>>, %arg4: memref<1x256xf32, #tpu.memory_space<vmem>>, %arg5: memref<2x256xf32, #tpu.memory_space<vmem>>) attributes {dimension_semantics = [#tpu.dimension_semantics<parallel>, #tpu.dimension_semantics<parallel>], iteration_bounds = array<i64: 1, 1>, scalar_prefetch = 1 : i64, scratch_operands = 0 : i64, tpu.core_type = #tpu.core_type<tc>, window_params = [{transform_indices = @transform_0, window_bounds = array<i64: 2, 256>}, {transform_indices = @transform_1, window_bounds = array<i64: 1, 256>}, {transform_indices = @transform_2, window_bounds = array<i64: 2, 256>}]} {
    %c0 = arith.constant 0 : index
    %c0_0 = arith.constant 0 : index
    %0 = vector.load %arg3[%c0, %c0_0] : memref<2x256xf32, #tpu.memory_space<vmem>>, vector<2x256xf32>
    %c0_1 = arith.constant 0 : index
    %c0_2 = arith.constant 0 : index
    %1 = vector.load %arg4[%c0_1, %c0_2] : memref<1x256xf32, #tpu.memory_space<vmem>>, vector<1x256xf32>
    %2 = vector.broadcast %1 : vector<1x256xf32> to vector<2x256xf32>
    %3 = arith.addf %0, %2 : vector<2x256xf32>
    %c0_3 = arith.constant 0 : index
    %c0_4 = arith.constant 0 : index
    %4 = vector.load %arg5[%c0_3, %c0_4] : memref<2x256xf32, #tpu.memory_space<vmem>>, vector<2x256xf32>
    tpu.vector_store %arg5[%c0_3, %c0_4], %3 {strides = array<i32>} : memref<2x256xf32, #tpu.memory_space<vmem>>, vector<2x256xf32>,
    return
  }
  func.func @transform_0(%arg0: i32, %arg1: i32, %arg2: memref<1xi32, #tpu.memory_space<smem>>) -> (i32, i32) {
    %c0_i32 = arith.constant 0 : i32
    return %arg1, %arg0 : i32, i32
  }
  func.func @transform_1(%arg0: i32, %arg1: i32, %arg2: memref<1xi32, #tpu.memory_space<smem>>) -> (i32, i32) {
    %c0_i32 = arith.constant 0 : i32
    %c0_i32_0 = arith.constant 0 : i32
    return %c0_i32, %arg0 : i32, i32
  }
  func.func @transform_2(%arg0: i32, %arg1: i32, %arg2: memref<1xi32, #tpu.memory_space<smem>>) -> (i32, i32) {
    %c0_i32 = arith.constant 0 : i32
    return %arg1, %arg0 : i32, i32
  }
}

</mosaic_0001>

<llo_original>
// kernel: tpu_custom_call.1
$region0: #{tpu_custom_call.1}
  #allocation0 [shape = 'u32[]', space=smem, size = 0x4, offset = 0x4, fixed_abs, tag = 'smem constant byte address 0x4 - core index']
  #allocation1 [shape = 'u32[144,128]{1,0:T(1,128)}', space=vmem, size = 0x12000, scoped, tag = 'internal scratch']
  #allocation2 [shape = 's32[1]{0}', space=sflag, size = 0x4, scoped, tag = 'scoped memory for tpu_custom_call.1']
  #allocation3 [shape = 's32[1]{0:T(128)S(6)}', space=smem, size = 0x200, scoped, tag = 'prefetched SMEM operand 0']
  %s0 = inlined_call_operand.<no memory space> [shape: s32[1], index: 0, kind: input, shape index: {}]
  %s1 = inlined_call_operand.hbm [shape: f32[2,256], index: 1, kind: input, shape index: {}]
  %s2 = inlined_call_operand.hbm [shape: f32[1,160000], index: 2, kind: input, shape index: {}]
  %s3 = inlined_call_operand.hbm [shape: f32[2,256], index: 3, kind: output, shape index: {}]
  %s4 = sld [smem:[#allocation0]]
  $region26: #{tpu_custom_call.1} parent=0
    _
  %s6 = ssub.s32 1, %s4
  %s7 = scalar_select 0, %s6, %s4
  %8 = sst [smem:[#allocation3]] %s0
  $region1: #{tpu_custom_call.1} parent=0
    #allocation4 [shape = 'u8[2048]{0}', space=vmem, size = 0x800, scoped, tag = 'input window, operand 1, single buffered']
    #allocation5 [shape = 's32[1]{0}', space=sflag, size = 0x4, scoped, tag = 'scoped memory for tpu_custom_call.1']
    #allocation6 [shape = 's32[1]{0}', space=sflag, size = 0x4, scoped, tag = 'scoped memory for tpu_custom_call.1']
    #allocation7 [shape = 'u8[1024]{0}', space=vmem, size = 0x400, scoped, tag = 'input window, operand 2, single buffered']
    #allocation8 [shape = 's32[1]{0}', space=sflag, size = 0x4, scoped, tag = 'scoped memory for tpu_custom_call.1']
    #allocation9 [shape = 'u8[2048]{0}', space=vmem, size = 0x800, scoped, tag = 'output window, operand 0, single buffered']
    %9 = vsyncpa [#allocation5], 0
    %10 = vsyncpa [#allocation8], 0
    %11 = vsyncpa [#allocation6], 0
    // Predicated region
    $region2: #{tpu_custom_call.1} parent=1 // pred_check
      _
    $region3: #{tpu_custom_call.1} parent=1 // pred_check_branch
      %13 = sbr.rel (0) target = $region5
    $region4: #{tpu_custom_call.1} parent=1 // pred_region
      %s15 = ssub.s32 64, 64
      %16 = vsyncadd [#allocation5], %s15
      %s18 = sshll.u32 [#allocation4], 4
      %s19 = int_to_ptr.vmem [resolvable:$true] %s18
      %21 = dma.hbm_to_vmem [thread:$0]  %s1, 64, %s19, [#allocation5]
    $region5: #{tpu_custom_call.1} parent=1 // pred_fallthru
      _
    // Predicated region
    $region6: #{tpu_custom_call.1} parent=1 // pred_check
      _
    $region7: #{tpu_custom_call.1} parent=1 // pred_check_branch
      %23 = sbr.rel (0) target = $region9
    $region8: #{tpu_custom_call.1} parent=1 // pred_region
      %s25 = ssub.s32 32, 32
      %26 = vsyncadd [#allocation8], %s25
      %s28 = sshll.u32 [#allocation7], 4
      %s29 = int_to_ptr.vmem [resolvable:$true] %s28
      %31 = dma.hbm_to_vmem [thread:$0]  %s2, 32, %s29, [#allocation8]
    $region9: #{tpu_custom_call.1} parent=1 // pred_fallthru
      _
    // Predicated region
    $region10: #{tpu_custom_call.1} parent=1 // pred_check
      _
    $region11: #{tpu_custom_call.1} parent=1 // pred_check_branch
      %33 = sbr.rel (0) target = $region13
    $region12: #{tpu_custom_call.1} parent=1 // pred_region
      %34 = dma.done [#allocation5], 64
    $region13: #{tpu_custom_call.1} parent=1 // pred_fallthru
      _
    // Predicated region
    $region14: #{tpu_custom_call.1} parent=1 // pred_check
      _
    $region15: #{tpu_custom_call.1} parent=1 // pred_check_branch
      %36 = sbr.rel (0) target = $region17
    $region16: #{tpu_custom_call.1} parent=1 // pred_region
      %37 = dma.done [#allocation8], 32
    $region17: #{tpu_custom_call.1} parent=1 // pred_fallthru
      _
    %v38 = vld [vmem:[#allocation4] sm:$0xf]
    %v39 = vld [vmem:[#allocation7] sm:$0x3]
    %v41 = vlaneseq
    %v42 = vshrl.u32 %v41, 7
    %v43 = vsub.s32 0, %v42
    %v44 = vrot.slane %v39, %v43
    %v45 = vlaneseq
    %v46 = vshrl.u32 %v45, 7
    %v47 = vsub.s32 1, %v46
    %v48 = vrot.slane %v39, %v47
    %v49 = vcombine.low %v44, %v48
    %v51 = vunpack.c.l.s4 1983009808
    %v52 = vunpack.c.0.s8 %v51
    %v53 = vlaneseq
    %v54 = vshrl.u32 %v53, 7
    %v55 = vsub.s32 %v52, %v54
    %v56 = vrot.slane %v49, %v55
    %v58 = vadd.f32 %v38, %v56
    %59 = vst [vmem:[#allocation9] sm:$0xf] %v58
    // Predicated region
    $region18: #{tpu_custom_call.1} parent=1 // pred_check
      _
    $region19: #{tpu_custom_call.1} parent=1 // pred_check_branch
      %61 = sbr.rel (0) target = $region21
    $region20: #{tpu_custom_call.1} parent=1 // pred_region
      %s63 = ssub.s32 64, 64
      %64 = vsyncadd [#allocation6], %s63
      %s66 = sshll.u32 [#allocation9], 4
      %s67 = int_to_ptr.vmem [resolvable:$true] %s66
      %69 = dma.vmem_to_hbm [thread:$0]  %s67, 64, %s3, [#allocation6]
    $region21: #{tpu_custom_call.1} parent=1 // pred_fallthru
      _
    // Predicated region
    $region22: #{tpu_custom_call.1} parent=1 // pred_check
      _
    $region23: #{tpu_custom_call.1} parent=1 // pred_check_branch
      %71 = sbr.rel (0) target = $region25
    $region24: #{tpu_custom_call.1} parent=1 // pred_region
      %72 = dma.done [#allocation6], 64
    $region25: #{tpu_custom_call.1} parent=1 // pred_fallthru
      _
    %73 = vsyncpa [#allocation5], 1
    %74 = vsyncpa [#allocation8], 1
    %75 = vsyncpa [#allocation6], 1

</llo_original>
